<compile_context>
chip_gen: v7x
topology: tpu7x:2x2x1
jax: 0.10.0
libtpu: 0.0.40
codegen_flags: <defaults>
</compile_context>

<pallas_src>
import jax
import jax.numpy as jnp
from jax.experimental import pallas as pl
from jax.experimental.pallas import tpu as pltpu


def _nsp_head_kernel(x_ref, w_ref, b_ref, o_ref):
    # x_ref: [TB, H] (VMEM), w_ref: [2, H] (VMEM, lane-dense), b_ref: [2] (SMEM)
    x = x_ref[...]                           # single load of the x tile
    w = w_ref[...].astype(x.dtype)           # tiny [2, H]
    # Both weight-row products from the same loaded tile; accumulate in f32.
    s0 = jnp.sum(x * w[0:1, :], axis=-1, keepdims=True, dtype=jnp.float32)
    s1 = jnp.sum(x * w[1:2, :], axis=-1, keepdims=True, dtype=jnp.float32)
    # Direct column stores (no concatenate / lane re-packing in the epilogue).
    o_ref[:, 0:1] = (s0 + b_ref[0]).astype(o_ref.dtype)
    o_ref[:, 1:2] = (s1 + b_ref[1]).astype(o_ref.dtype)


def _choose_tile_rows(batch: int, hidden: int, itemsize: int, block_rows: int) -> int:
    """Pick the per-step batch-tile height."""
    if batch < 16:
        # Tiny batch: one full-dim block (layout-legal for any B, incl. B < 8).
        return batch
    # Cap each x buffer at ~12 MiB (2 pipeline buffers -> ~24 MiB) so tiles fit
    # comfortably in v7x's 64 MiB VMEM and the raised scoped limit on v5e/v6e.
    budget_rows = max(8, (12 * 1024 * 1024) // (hidden * itemsize))
    tb = min(block_rows, budget_rows)
    # Force >= 2 tiles: software pipelining + both v7x TensorCores busy.
    half = (pl.cdiv(batch, 2) + 7) // 8 * 8
    tb = min(tb, half)
    return max(8, (tb // 8) * 8)


def bert_only_nsp_head(pooled_output: jax.Array,
                       weight: jax.Array,
                       bias: jax.Array,
                       *,
                       block_rows: int = 2048) -> jax.Array:
    """pooled_output: [B, H], weight: [2, H] (PyTorch layout), bias: [2] -> [B, 2]."""
    B, H = pooled_output.shape
    assert weight.shape == (2, H)
    assert bias.shape == (2,)

    x_itemsize = jnp.dtype(pooled_output.dtype).itemsize
    w_itemsize = jnp.dtype(weight.dtype).itemsize
    tb = _choose_tile_rows(B, H, x_itemsize, block_rows)
    n_blocks = pl.cdiv(B, tb)
    rows_streamed = n_blocks * tb

    # Scoped-VMEM budget: double-buffered x tile + lane-padded output tile +
    # weight/bias + headroom.  Raised above v5e's 16 MiB scoped default; with
    # the ~24 MiB tile cap this never exceeds v7x's 64 MiB physical VMEM.
    vmem_needed = (2 * tb * H * x_itemsize        # x double buffer
                   + 2 * tb * 128 * x_itemsize    # output tile (lane-padded)
                   + 2 * 8 * H * w_itemsize       # weight (sublane-padded)
                   + (2 << 20))                   # headroom
    vmem_limit = int(max(vmem_needed, 32 << 20))

    cost = pl.CostEstimate(
        flops=2 * B * H * 2,
        transcendentals=0,
        bytes_accessed=(rows_streamed * H * x_itemsize
                        + 2 * H * w_itemsize
                        + rows_streamed * 2 * x_itemsize
                        + 2 * 4),
    )

    return pl.pallas_call(
        _nsp_head_kernel,
        out_shape=jax.ShapeDtypeStruct((B, 2), pooled_output.dtype),
        grid_spec=pltpu.PrefetchScalarGridSpec(
            num_scalar_prefetch=0,
            grid=(n_blocks,),
            in_specs=[
                # x: one batch tile per grid step (streamed / double-buffered).
                pl.BlockSpec((tb, H), lambda i: (i, 0)),
                # weight: resident across all grid steps, lane-dense [2, H].
                pl.BlockSpec((2, H), lambda i: (0, 0)),
                # bias: two scalars in SMEM (no padded VMEM tile / extra DMA).
                pl.BlockSpec(memory_space=pltpu.MemorySpace.SMEM),
            ],
            out_specs=pl.BlockSpec((tb, 2), lambda i: (i, 0)),
        ),
        compiler_params=pltpu.CompilerParams(
            dimension_semantics=("parallel",),   # shard batch tiles across TCs
            vmem_limit_bytes=vmem_limit,
        ),
        cost_estimate=cost,
    )(pooled_output, weight, bias)


def _reference(pooled_output, weight, bias):
    return pooled_output.astype(jnp.float32) @ weight.T.astype(jnp.float32) + bias


if __name__ == "__main__":
    key = jax.random.PRNGKey(0)
    k_x, k_w, k_b, k_x2, k_x3 = jax.random.split(key, 5)

    # Small, deterministic config consistent with the module: batch=2, hidden=32.
    batch, hidden = 2, 32
    bound = 1.0 / (hidden ** 0.5)
    weight = jax.random.uniform(k_w, (2, hidden), jnp.float32, -bound, bound)
    bias = jax.random.uniform(k_b, (2,), jnp.float32, -bound, bound)
    pooled_output = jax.random.normal(k_x, (batch, hidden), jnp.float32)

    scores = bert_only_nsp_head(pooled_output, weight, bias)
    jax.block_until_ready(scores)
    ref = _reference(pooled_output, weight, bias)
    assert scores.shape == (batch, 2)
    assert jnp.allclose(scores, ref, atol=1e-5, rtol=1e-5)

    # Multi-block path with a partial last block and no wrapper-side padding:
    # B=20, tb=8 -> grid=(3,), last block masked by Pallas.
    batch2 = 20
    pooled2 = jax.random.normal(k_x2, (batch2, hidden), jnp.float32)
    scores2 = bert_only_nsp_head(pooled2, weight, bias, block_rows=8)
    jax.block_until_ready(scores2)
    ref2 = _reference(pooled2, weight, bias)
    assert scores2.shape == (batch2, 2)
    assert jnp.allclose(scores2, ref2, atol=1e-5, rtol=1e-5)

    # bf16 input path: bf16 multiply + f32 accumulation in-kernel, 2 tiles.
    batch3 = 32
    pooled3 = jax.random.normal(k_x3, (batch3, hidden), jnp.float32).astype(jnp.bfloat16)
    scores3 = bert_only_nsp_head(pooled3, weight, bias)
    jax.block_until_ready(scores3)
    ref3 = _reference(pooled3, weight, bias)
    assert scores3.shape == (batch3, 2)
    assert scores3.dtype == jnp.bfloat16
    assert jnp.allclose(scores3.astype(jnp.float32), ref3, atol=5e-2, rtol=5e-2)

    print("KERNEL_OK")
</pallas_src>

<mosaic_0001>
module attributes {stable_mosaic.version = 11 : i64} {
  func.func @_nsp_head_kernel(%arg0: i32, %arg1: memref<2x32xf32, #tpu.memory_space<vmem>>, %arg2: memref<2x32xf32, #tpu.memory_space<vmem>>, %arg3: memref<2xf32, #tpu.memory_space<smem>>, %arg4: memref<2x2xf32, #tpu.memory_space<vmem>>) attributes {dimension_semantics = [#tpu.dimension_semantics<parallel>], iteration_bounds = array<i64: 1>, scalar_prefetch = 0 : i64, scratch_operands = 0 : i64, tpu.core_type = #tpu.core_type<tc>, window_params = [{transform_indices = @transform_0, window_bounds = array<i64: 2, 32>}, {pipeline_mode = #tpu.pipeline_mode<synchronous>, transform_indices = @transform_1, window_bounds = array<i64: 2, 32>}, {transform_indices = @transform_2, window_bounds = array<i64: 2>}, {transform_indices = @transform_3, window_bounds = array<i64: 2, 2>}]} {
    %c0 = arith.constant 0 : index
    %c0_0 = arith.constant 0 : index
    %0 = vector.load %arg1[%c0, %c0_0] : memref<2x32xf32, #tpu.memory_space<vmem>>, vector<2x32xf32>
    %c0_1 = arith.constant 0 : index
    %c0_2 = arith.constant 0 : index
    %1 = vector.load %arg2[%c0_1, %c0_2] : memref<2x32xf32, #tpu.memory_space<vmem>>, vector<2x32xf32>
    %2 = vector.extract_strided_slice %1 {offsets = [0, 0], sizes = [1, 32], strides = [1, 1]} : vector<2x32xf32> to vector<1x32xf32>
    %3 = vector.broadcast %2 : vector<1x32xf32> to vector<2x32xf32>
    %4 = arith.mulf %0, %3 : vector<2x32xf32>
    %cst = arith.constant dense<0.000000e+00> : vector<2xf32>
    %5 = vector.multi_reduction <add>, %4, %cst [1] : vector<2x32xf32> to vector<2xf32>
    %6 = vector.shape_cast %5 : vector<2xf32> to vector<2x1xf32>
    %7 = vector.extract_strided_slice %1 {offsets = [1, 0], sizes = [1, 32], strides = [1, 1]} : vector<2x32xf32> to vector<1x32xf32>
    %8 = vector.broadcast %7 : vector<1x32xf32> to vector<2x32xf32>
    %9 = arith.mulf %0, %8 : vector<2x32xf32>
    %cst_3 = arith.constant dense<0.000000e+00> : vector<2xf32>
    %10 = vector.multi_reduction <add>, %9, %cst_3 [1] : vector<2x32xf32> to vector<2xf32>
    %11 = vector.shape_cast %10 : vector<2xf32> to vector<2x1xf32>
    %c0_4 = arith.constant 0 : index
    %12 = memref.load %arg3[%c0_4] : memref<2xf32, #tpu.memory_space<smem>>
    %13 = vector.broadcast %12 : f32 to vector<2x1xf32>
    %14 = arith.addf %6, %13 : vector<2x1xf32>
    %c0_5 = arith.constant 0 : index
    %c0_6 = arith.constant 0 : index
    %15 = vector.load %arg4[%c0_5, %c0_6] : memref<2x2xf32, #tpu.memory_space<vmem>>, vector<2x1xf32>
    tpu.vector_store %arg4[%c0_5, %c0_6], %14 {strides = array<i32>} : memref<2x2xf32, #tpu.memory_space<vmem>>, vector<2x1xf32>,
    %c1 = arith.constant 1 : index
    %16 = memref.load %arg3[%c1] : memref<2xf32, #tpu.memory_space<smem>>
    %17 = vector.broadcast %16 : f32 to vector<2x1xf32>
    %18 = arith.addf %11, %17 : vector<2x1xf32>
    %c0_7 = arith.constant 0 : index
    %c1_8 = arith.constant 1 : index
    %19 = vector.load %arg4[%c0_7, %c1_8] : memref<2x2xf32, #tpu.memory_space<vmem>>, vector<2x1xf32>
    tpu.vector_store %arg4[%c0_7, %c1_8], %18 {strides = array<i32>} : memref<2x2xf32, #tpu.memory_space<vmem>>, vector<2x1xf32>,
    return
  }
  func.func @transform_0(%arg0: i32) -> (i32, i32) {
    %c0_i32 = arith.constant 0 : i32
    %c0_i32_0 = arith.constant 0 : i32
    return %arg0, %c0_i32 : i32, i32
  }
  func.func @transform_1(%arg0: i32) -> (i32, i32) {
    %c0_i32 = arith.constant 0 : i32
    %c0_i32_0 = arith.constant 0 : i32
    %c0_i32_1 = arith.constant 0 : i32
    return %c0_i32, %c0_i32_0 : i32, i32
  }
  func.func @transform_2(%arg0: i32) -> i32 {
    %c0_i32 = arith.constant 0 : i32
    %c0_i32_0 = arith.constant 0 : i32
    return %c0_i32 : i32
  }
  func.func @transform_3(%arg0: i32) -> (i32, i32) {
    %c0_i32 = arith.constant 0 : i32
    %c0_i32_0 = arith.constant 0 : i32
    return %arg0, %c0_i32 : i32, i32
  }
}

</mosaic_0001>

<llo_original>
// kernel: tpu_custom_call.1
$region0: #{tpu_custom_call.1}
  #allocation0 [shape = 'u32[]', space=smem, size = 0x4, offset = 0x4, fixed_abs, tag = 'smem constant byte address 0x4 - core index']
  #allocation1 [shape = 'u32[144,128]{1,0:T(1,128)}', space=vmem, size = 0x12000, scoped, tag = 'internal scratch']
  %s0 = inlined_call_operand.hbm [shape: f32[2,32], index: 0, kind: input, shape index: {}]
  %s1 = inlined_call_operand.vmem [shape: f32[2,32], index: 1, kind: input, shape index: {}]
  %s2 = inlined_call_operand.vmem [shape: f32[2], index: 2, kind: input, shape index: {}]
  %s3 = inlined_call_operand.hbm [shape: f32[2,2], index: 3, kind: output, shape index: {}]
  %s4 = sld [smem:[#allocation0]]
  $region30: #{tpu_custom_call.1} parent=0
    _
  %s6 = ssub.s32 1, %s4
  %s7 = scalar_select 0, %s6, %s4
  $region1: #{tpu_custom_call.1} parent=0
    #allocation2 [shape = 'u8[1024]{0}', space=vmem, size = 0x400, scoped, tag = 'input window, operand 0, single buffered']
    #allocation3 [shape = 's32[1]{0}', space=sflag, size = 0x4, scoped, tag = 'scoped memory for tpu_custom_call.1']
    #allocation4 [shape = 's32[1]{0}', space=sflag, size = 0x4, scoped, tag = 'scoped memory for tpu_custom_call.1']
    #allocation5 [shape = 's32[1]{0}', space=sflag, size = 0x4, scoped, tag = 'scoped memory for tpu_custom_call.1']
    #allocation6 [shape = 'u8[512]{0}', space=smem, size = 0x200, scoped, tag = 'input window, operand 2, single buffered']
    #allocation7 [shape = 'u8[1024]{0}', space=vmem, size = 0x400, scoped, tag = 'output window, operand 0, single buffered']
    %8 = vsyncpa [#allocation3], 0
    %9 = vsyncpa [#allocation5], 0
    %10 = vsyncpa [#allocation4], 0
    // Predicated region
    $region2: #{tpu_custom_call.1} parent=1 // pred_check
      _
    $region3: #{tpu_custom_call.1} parent=1 // pred_check_branch
      %12 = sbr.rel (0) target = $region5
    $region4: #{tpu_custom_call.1} parent=1 // pred_region
      %s14 = ssub.s32 32, 32
      %15 = vsyncadd [#allocation3], %s14
      %s17 = sshll.u32 [#allocation2], 4
      %s18 = int_to_ptr.vmem [resolvable:$true] %s17
      %20 = dma.hbm_to_vmem [thread:$0]  %s0, 32, %s18, [#allocation3]
    $region5: #{tpu_custom_call.1} parent=1 // pred_fallthru
      _
    // Predicated region
    $region6: #{tpu_custom_call.1} parent=1 // pred_check
      _
    $region7: #{tpu_custom_call.1} parent=1 // pred_check_branch
      %22 = sbr.rel (0) target = $region9
    $region8: #{tpu_custom_call.1} parent=1 // pred_region
      _
    $region9: #{tpu_custom_call.1} parent=1 // pred_fallthru
      _
    // Predicated region
    $region10: #{tpu_custom_call.1} parent=1 // pred_check
      _
    $region11: #{tpu_custom_call.1} parent=1 // pred_check_branch
      %24 = sbr.rel (0) target = $region13
    $region12: #{tpu_custom_call.1} parent=1 // pred_region
      %s26 = ssub.s32 16, 16
      %27 = vsyncadd [#allocation5], %s26
      %s29 = sshll.u32 %s2, 4
      %s30 = int_to_ptr.vmem [resolvable:$true] %s29
      %32 = dma.vmem_to_smem %s30, 16, [#allocation6], [#allocation5]
    $region13: #{tpu_custom_call.1} parent=1 // pred_fallthru
      _
    // Predicated region
    $region14: #{tpu_custom_call.1} parent=1 // pred_check
      _
    $region15: #{tpu_custom_call.1} parent=1 // pred_check_branch
      %34 = sbr.rel (0) target = $region17
    $region16: #{tpu_custom_call.1} parent=1 // pred_region
      %35 = dma.done [#allocation3], 32
    $region17: #{tpu_custom_call.1} parent=1 // pred_fallthru
      _
    // Predicated region
    $region18: #{tpu_custom_call.1} parent=1 // pred_check
      _
    $region19: #{tpu_custom_call.1} parent=1 // pred_check_branch
      %37 = sbr.rel (0) target = $region21
    $region20: #{tpu_custom_call.1} parent=1 // pred_region
      %38 = dma.done [#allocation5], 16
    $region21: #{tpu_custom_call.1} parent=1 // pred_fallthru
      _
    %39 = sfence
    %v40 = vld [vmem:[#allocation2] sm:$0x3]
    %v41 = vld [vmem:[%s1] sm:$0x3]
    %v42 = vlaneseq
    %v43 = vshrl.u32 %v42, 7
    %v44 = vsub.s32 0, %v43
    %v45 = vrot.slane %v41, %v44
    %v46 = vmul.f32 %v40, %v45
    %vm47 = vcmask 254976
    %v48 = vsel %vm47, %v46, 0.0
    %49 = vadd.xlane.f32.xlu0 %v48
    %v50 = vpop.xlane.xlu0 %49
    %v51 = vlaneseq
    %v52 = vshrl.u32 %v51, 7
    %v53 = vsub.s32 1, %v52
    %v54 = vrot.slane %v41, %v53
    %v55 = vmul.f32 %v40, %v54
    %v56 = vsel %vm47, %v55, 0.0
    %57 = vadd.xlane.f32.xlu0 %v56
    %v58 = vpop.xlane.xlu0 %57
    %s59 = sld [smem:[#allocation6]]
    %v60 = vstv %s59
    %v61 = vadd.f32 %v50, %v60
    %vm62 = vcmask 1024
    %63 = vst.msk [vmem:[#allocation7] sm:$0x3] %vm62, %v61
    %s64 = sld [smem:[#allocation6 + $0x1]]
    %v65 = vstv %s64
    %v66 = vadd.f32 %v58, %v65
    %vm67 = vcmask 9224
    %68 = vst.msk [vmem:[#allocation7] sm:$0x3] %vm67, %v66
    // Predicated region
    $region22: #{tpu_custom_call.1} parent=1 // pred_check
      _
    $region23: #{tpu_custom_call.1} parent=1 // pred_check_branch
      %70 = sbr.rel (0) target = $region25
    $region24: #{tpu_custom_call.1} parent=1 // pred_region
      %s72 = ssub.s32 32, 32
      %73 = vsyncadd [#allocation4], %s72
      %s75 = sshll.u32 [#allocation7], 4
      %s76 = int_to_ptr.vmem [resolvable:$true] %s75
      %78 = dma.vmem_to_hbm [thread:$0]  %s76, 32, %s3, [#allocation4]
    $region25: #{tpu_custom_call.1} parent=1 // pred_fallthru
      _
    // Predicated region
    $region26: #{tpu_custom_call.1} parent=1 // pred_check
      _
    $region27: #{tpu_custom_call.1} parent=1 // pred_check_branch
      %80 = sbr.rel (0) target = $region29
    $region28: #{tpu_custom_call.1} parent=1 // pred_region
      %81 = dma.done [#allocation4], 32
    $region29: #{tpu_custom_call.1} parent=1 // pred_fallthru
      _
    %82 = vsyncpa [#allocation3], 1
    %83 = vsyncpa [#allocation4], 1
    %84 = vsyncpa [#allocation5], 1

</llo_original>
